<compile_context>
chip_gen: v5e
topology: v5e:2x2
jax: 0.10.0
libtpu: 0.0.40
codegen_flags: <defaults>
</compile_context>

<pallas_src>
import jax
import jax.numpy as jnp
from jax.experimental import pallas as pl
from jax.experimental.pallas import tpu as pltpu


_STEP_BUDGET_BYTES = 8 * 1024 * 1024    # per-grid-step working-set target
_VMEM_LIMIT_BYTES = 48 * 1024 * 1024    # < v7x 64 MiB physical, > v5e 16 MiB default


def _multiscale_mask_kernel(idx_ref, x_ref, res_ref, mask_ref):
    # idx_ref : (1, ...)  int32   -- scale index per spatial location (one tile)
    # x_ref   : (c, ...)  x.dtype -- features for one batch element / tile
    # res_ref : (c, ...)  x.dtype -- masked features
    # mask_ref: (c, ...)  bool (or int8 fallback)
    scale_i = pl.program_id(2)                        # scale axis is innermost
    keep = idx_ref[...] != scale_i                    # (1, ...) bool
    x = x_ref[...]
    res_ref[...] = x * keep.astype(x.dtype)           # broadcast over channels
    mask_ref[...] = jnp.broadcast_to(keep, mask_ref.shape).astype(mask_ref.dtype)


def _round_up(n: int, m: int) -> int:
    return ((n + m - 1) // m) * m


def _pick_lane_tile(c: int, hw: int, x_bytes: int,
                    budget: int = _STEP_BUDGET_BYTES) -> int:
    """Lane-dense (multiple-of-128) spatial tile for the flattened layout."""
    per_lane = 4 + c * (2 * x_bytes + 1)              # idx + x + res + mask
    lanes = max(128, (budget // per_lane) // 128 * 128)
    lanes = min(lanes, _round_up(hw, 128))
    if lanes > hw:                                    # whole hw fits the budget
        lanes = hw                                    # full-dim block is always legal
    return lanes


def _pick_row_tile(c: int, h: int, w: int, x_bytes: int,
                   budget: int = _STEP_BUDGET_BYTES) -> int:
    """Sublane-dense (multiple-of-8) row tile for the un-reshaped 4-D layout."""
    per_row = w * (4 + c * (2 * x_bytes + 1))
    rows = max(8, (budget // per_row) // 8 * 8)
    rows = min(rows, _round_up(h, 8))
    if rows > h:
        rows = h
    return rows


def multiscale_mask(x: jnp.ndarray, mask_index: jnp.ndarray, scale_num: int):
    """x: (b, c, h, w); mask_index: (b, 1, h, w) int in [0, scale_num)."""
    if x.ndim == 3:                                   # mirror the PyTorch unsqueeze
        x = x[None]
    b, c, h, w = x.shape
    mask_index = mask_index.reshape(b, 1, h, w).astype(jnp.int32)
    x_bytes = jnp.dtype(x.dtype).itemsize

    # Fast path only if w is lane-dense AND the minimum (8-row) tile still fits
    # comfortably under the VMEM limit when double-buffered.
    min_5d_step = 8 * w * (4 + c * (2 * x_bytes + 1))
    use_5d = (w % 128 == 0) and (2 * min_5d_step <= _VMEM_LIMIT_BYTES)
    # TODO(synk): for extreme c*w where even an 8-row tile overflows VMEM, add a
    # channel-tiling grid axis instead of relying on the flattened fallback.

    if use_5d:
        # ---- fast path: tile the original layout, no reshapes anywhere ----
        sp_tile = _pick_row_tile(c, h, w, x_bytes)
        n_sp = pl.cdiv(h, sp_tile)
        if b * n_sp < 2 and h >= 16:                  # keep both v7x TCs busy
            sp_tile = max(8, _round_up(pl.cdiv(h, 2), 8))
            n_sp = pl.cdiv(h, sp_tile)
        in_specs = [
            pl.BlockSpec((None, 1, sp_tile, w), lambda bi, si, s: (bi, 0, si, 0)),
            pl.BlockSpec((None, c, sp_tile, w), lambda bi, si, s: (bi, 0, si, 0)),
        ]
        out_spec = pl.BlockSpec((None, None, c, sp_tile, w),
                                lambda bi, si, s: (s, bi, 0, si, 0))
        out_arr_shape = (scale_num, b, c, h, w)
        idx_in, x_in = mask_index, x
        needs_reshape = False
    else:
        # ---- fallback: flatten (h, w) -> hw for lane-dense tiles.  The
        # reshapes may cost a relayout copy; acceptable for small/awkward w. ----
        hw = h * w
        sp_tile = _pick_lane_tile(c, hw, x_bytes)
        n_sp = pl.cdiv(hw, sp_tile)
        if b * n_sp < 2 and hw >= 256:                # keep both v7x TCs busy
            sp_tile = max(128, _round_up(pl.cdiv(hw, 2), 128))
            n_sp = pl.cdiv(hw, sp_tile)
        in_specs = [
            pl.BlockSpec((None, 1, sp_tile), lambda bi, si, s: (bi, 0, si)),
            pl.BlockSpec((None, c, sp_tile), lambda bi, si, s: (bi, 0, si)),
        ]
        out_spec = pl.BlockSpec((None, None, c, sp_tile),
                                lambda bi, si, s: (s, bi, 0, si)),
        out_spec = out_spec[0]
        out_arr_shape = (scale_num, b, c, hw)
        idx_in, x_in = mask_index.reshape(b, 1, hw), x.reshape(b, c, hw)
        needs_reshape = True

    def run(mask_dtype):
        return pl.pallas_call(
            _multiscale_mask_kernel,
            out_shape=(
                jax.ShapeDtypeStruct(out_arr_shape, x.dtype),
                jax.ShapeDtypeStruct(out_arr_shape, mask_dtype),
            ),
            grid_spec=pltpu.PrefetchScalarGridSpec(
                num_scalar_prefetch=0,
                # scale innermost: idx/x block indices are constant across it,
                # so their HBM->VMEM DMAs are skipped for scale_num-1 steps.
                grid=(b, n_sp, scale_num),
                in_specs=in_specs,
                out_specs=[out_spec, out_spec],
            ),
            compiler_params=pltpu.CompilerParams(
                dimension_semantics=("parallel", "parallel", "arbitrary"),
                vmem_limit_bytes=_VMEM_LIMIT_BYTES,
            ),
        )(idx_in, x_in)

    try:
        # Preferred path: bool output straight from the kernel (no extra pass).
        res, masks = jax.block_until_ready(run(jnp.bool_))
    except Exception:
        # Fallback if this jaxlib's Mosaic rejects bool-typed pallas outputs.
        res, masks8 = run(jnp.int8)
        masks = masks8.astype(jnp.bool_)

    if needs_reshape:
        res = res.reshape(scale_num, b, c, h, w)
        masks = masks.reshape(scale_num, b, c, h, w)
    return res, masks


if __name__ == "__main__":
    scale_num = 2
    b, c, h, w = 2, 4, 16, 16

    key = jax.random.PRNGKey(0)
    kx, kidx = jax.random.split(key)
    x = jax.random.normal(kx, (b, c, h, w), dtype=jnp.float32)
    # equivalent of torch.randint(0, scale_num, (b, 1, h, w))
    mask_index = jax.random.randint(kidx, (b, 1, h, w), 0, scale_num, dtype=jnp.int32)

    res, masks = multiscale_mask(x, mask_index, scale_num)
    jax.block_until_ready((res, masks))

    # reference check (pure JAX)
    idx_bc = jnp.broadcast_to(mask_index, (b, c, h, w))
    ref_masks = jnp.stack([idx_bc != i for i in range(scale_num)], axis=0)
    ref_res = ref_masks.astype(x.dtype) * x[None]
    assert res.shape == (scale_num, b, c, h, w)
    assert masks.shape == (scale_num, b, c, h, w) and masks.dtype == jnp.bool_
    assert bool(jnp.all(masks == ref_masks))
    assert bool(jnp.allclose(res, ref_res))

    print("KERNEL_OK")
</pallas_src>

<mosaic_0001>
module attributes {stable_mosaic.version = 11 : i64} {
  func.func @_multiscale_mask_kernel(%arg0: i32, %arg1: i32, %arg2: i32, %arg3: memref<1x1x256xi32, #tpu.memory_space<vmem>>, %arg4: memref<1x4x256xf32, #tpu.memory_space<vmem>>, %arg5: memref<1x1x4x256xf32, #tpu.memory_space<vmem>>, %arg6: memref<1x1x4x256xi32, #tpu.memory_space<vmem>>) attributes {dimension_semantics = [#tpu.dimension_semantics<parallel>, #tpu.dimension_semantics<parallel>, #tpu.dimension_semantics<arbitrary>], iteration_bounds = array<i64: 2, 1, 2>, scalar_prefetch = 0 : i64, scratch_operands = 0 : i64, tpu.core_type = #tpu.core_type<tc>, window_params = [{transform_indices = @transform_0, window_bounds = array<i64: 1, 1, 256>}, {transform_indices = @transform_1, window_bounds = array<i64: 1, 4, 256>}, {transform_indices = @transform_2, window_bounds = array<i64: 1, 1, 4, 256>}, {transform_indices = @transform_3, window_bounds = array<i64: 1, 1, 4, 256>}]} {
    %c0 = arith.constant 0 : index
    %c0_0 = arith.constant 0 : index
    %c0_1 = arith.constant 0 : index
    %0 = vector.load %arg3[%c0, %c0_0, %c0_1] : memref<1x1x256xi32, #tpu.memory_space<vmem>>, vector<1x1x256xi32>
    %1 = vector.shape_cast %0 : vector<1x1x256xi32> to vector<1x256xi32>
    %2 = vector.broadcast %arg2 : i32 to vector<1x256xi32>
    %3 = arith.cmpi ne, %1, %2 : vector<1x256xi32>
    %c0_2 = arith.constant 0 : index
    %c0_3 = arith.constant 0 : index
    %c0_4 = arith.constant 0 : index
    %4 = vector.load %arg4[%c0_2, %c0_3, %c0_4] : memref<1x4x256xf32, #tpu.memory_space<vmem>>, vector<1x4x256xf32>
    %5 = vector.shape_cast %4 : vector<1x4x256xf32> to vector<4x256xf32>
    %6 = arith.extui %3 : vector<1x256xi1> to vector<1x256xi32>
    %7 = arith.sitofp %6 : vector<1x256xi32> to vector<1x256xf32>
    %8 = vector.broadcast %7 : vector<1x256xf32> to vector<4x256xf32>
    %9 = arith.mulf %5, %8 : vector<4x256xf32>
    %c0_5 = arith.constant 0 : index
    %c0_6 = arith.constant 0 : index
    %c0_7 = arith.constant 0 : index
    %c0_8 = arith.constant 0 : index
    %10 = vector.load %arg5[%c0_5, %c0_6, %c0_7, %c0_8] : memref<1x1x4x256xf32, #tpu.memory_space<vmem>>, vector<1x1x4x256xf32>
    %11 = vector.shape_cast %10 : vector<1x1x4x256xf32> to vector<4x256xf32>
    %12 = vector.shape_cast %9 : vector<4x256xf32> to vector<1x1x4x256xf32>
    tpu.vector_store %arg5[%c0_5, %c0_6, %c0_7, %c0_8], %12 {strides = array<i32>} : memref<1x1x4x256xf32, #tpu.memory_space<vmem>>, vector<1x1x4x256xf32>,
    %13 = vector.shape_cast %3 : vector<1x256xi1> to vector<1x256xi1>
    %14 = vector.broadcast %13 : vector<1x256xi1> to vector<4x256xi1>
    %c0_9 = arith.constant 0 : index
    %c0_10 = arith.constant 0 : index
    %c0_11 = arith.constant 0 : index
    %c0_12 = arith.constant 0 : index
    %15 = vector.load %arg6[%c0_9, %c0_10, %c0_11, %c0_12] : memref<1x1x4x256xi32, #tpu.memory_space<vmem>>, vector<1x1x4x256xi32>
    %16 = arith.extui %14 : vector<4x256xi1> to vector<4x256xi32>
    %17 = vector.shape_cast %15 : vector<1x1x4x256xi32> to vector<4x256xi32>
    %18 = vector.shape_cast %16 : vector<4x256xi32> to vector<1x1x4x256xi32>
    %cst = arith.constant dense<0> : vector<4x256xi32>
    %19 = arith.cmpi ne, %17, %cst : vector<4x256xi32>
    tpu.vector_store %arg6[%c0_9, %c0_10, %c0_11, %c0_12], %18 {strides = array<i32>} : memref<1x1x4x256xi32, #tpu.memory_space<vmem>>, vector<1x1x4x256xi32>,
    return
  }
  func.func @transform_0(%arg0: i32, %arg1: i32, %arg2: i32) -> (i32, i32, i32) {
    %c0_i32 = arith.constant 0 : i32
    %c0_i32_0 = arith.constant 0 : i32
    return %arg0, %c0_i32, %arg1 : i32, i32, i32
  }
  func.func @transform_1(%arg0: i32, %arg1: i32, %arg2: i32) -> (i32, i32, i32) {
    %c0_i32 = arith.constant 0 : i32
    %c0_i32_0 = arith.constant 0 : i32
    return %arg0, %c0_i32, %arg1 : i32, i32, i32
  }
  func.func @transform_2(%arg0: i32, %arg1: i32, %arg2: i32) -> (i32, i32, i32, i32) {
    %c0_i32 = arith.constant 0 : i32
    %c0_i32_0 = arith.constant 0 : i32
    return %arg2, %arg0, %c0_i32, %arg1 : i32, i32, i32, i32
  }
  func.func @transform_3(%arg0: i32, %arg1: i32, %arg2: i32) -> (i32, i32, i32, i32) {
    %c0_i32 = arith.constant 0 : i32
    %c0_i32_0 = arith.constant 0 : i32
    return %arg2, %arg0, %c0_i32, %arg1 : i32, i32, i32, i32
  }
}

module attributes {stable_mosaic.version = 11 : i64} {
  func.func @_multiscale_mask_kernel(%arg0: i32, %arg1: i32, %arg2: i32, %arg3: memref<1x1x256xi32, #tpu.memory_space<vmem>>, %arg4: memref<1x4x256xf32, #tpu.memory_space<vmem>>, %arg5: memref<1x1x4x256xf32, #tpu.memory_space<vmem>>, %arg6: memref<1x1x4x256xi8, #tpu.memory_space<vmem>>) attributes {dimension_semantics = [#tpu.dimension_semantics<parallel>, #tpu.dimension_semantics<parallel>, #tpu.dimension_semantics<arbitrary>], iteration_bounds = array<i64: 2, 1, 2>, scalar_prefetch = 0 : i64, scratch_operands = 0 : i64, tpu.core_type = #tpu.core_type<tc>, window_params = [{transform_indices = @transform_0, window_bounds = array<i64: 1, 1, 256>}, {transform_indices = @transform_1, window_bounds = array<i64: 1, 4, 256>}, {transform_indices = @transform_2, window_bounds = array<i64: 1, 1, 4, 256>}, {transform_indices = @transform_3, window_bounds = array<i64: 1, 1, 4, 256>}]} {
    %c0 = arith.constant 0 : index
    %c0_0 = arith.constant 0 : index
    %c0_1 = arith.constant 0 : index
    %0 = vector.load %arg3[%c0, %c0_0, %c0_1] : memref<1x1x256xi32, #tpu.memory_space<vmem>>, vector<1x1x256xi32>
    %1 = vector.shape_cast %0 : vector<1x1x256xi32> to vector<1x256xi32>
    %2 = vector.broadcast %arg2 : i32 to vector<1x256xi32>
    %3 = arith.cmpi ne, %1, %2 : vector<1x256xi32>
    %c0_2 = arith.constant 0 : index
    %c0_3 = arith.constant 0 : index
    %c0_4 = arith.constant 0 : index
    %4 = vector.load %arg4[%c0_2, %c0_3, %c0_4] : memref<1x4x256xf32, #tpu.memory_space<vmem>>, vector<1x4x256xf32>
    %5 = vector.shape_cast %4 : vector<1x4x256xf32> to vector<4x256xf32>
    %6 = arith.extui %3 : vector<1x256xi1> to vector<1x256xi32>
    %7 = arith.sitofp %6 : vector<1x256xi32> to vector<1x256xf32>
    %8 = vector.broadcast %7 : vector<1x256xf32> to vector<4x256xf32>
    %9 = arith.mulf %5, %8 : vector<4x256xf32>
    %c0_5 = arith.constant 0 : index
    %c0_6 = arith.constant 0 : index
    %c0_7 = arith.constant 0 : index
    %c0_8 = arith.constant 0 : index
    %10 = vector.load %arg5[%c0_5, %c0_6, %c0_7, %c0_8] : memref<1x1x4x256xf32, #tpu.memory_space<vmem>>, vector<1x1x4x256xf32>
    %11 = vector.shape_cast %10 : vector<1x1x4x256xf32> to vector<4x256xf32>
    %12 = vector.shape_cast %9 : vector<4x256xf32> to vector<1x1x4x256xf32>
    tpu.vector_store %arg5[%c0_5, %c0_6, %c0_7, %c0_8], %12 {strides = array<i32>} : memref<1x1x4x256xf32, #tpu.memory_space<vmem>>, vector<1x1x4x256xf32>,
    %13 = vector.shape_cast %3 : vector<1x256xi1> to vector<1x256xi1>
    %14 = vector.broadcast %13 : vector<1x256xi1> to vector<4x256xi1>
    %15 = arith.extui %14 : vector<4x256xi1> to vector<4x256xi8>
    %c0_9 = arith.constant 0 : index
    %c0_10 = arith.constant 0 : index
    %c0_11 = arith.constant 0 : index
    %c0_12 = arith.constant 0 : index
    %16 = vector.load %arg6[%c0_9, %c0_10, %c0_11, %c0_12] : memref<1x1x4x256xi8, #tpu.memory_space<vmem>>, vector<1x1x4x256xi8>
    %17 = vector.shape_cast %16 : vector<1x1x4x256xi8> to vector<4x256xi8>
    %18 = vector.shape_cast %15 : vector<4x256xi8> to vector<1x1x4x256xi8>
    tpu.vector_store %arg6[%c0_9, %c0_10, %c0_11, %c0_12], %18 {strides = array<i32>} : memref<1x1x4x256xi8, #tpu.memory_space<vmem>>, vector<1x1x4x256xi8>,
    return
  }
  func.func @transform_0(%arg0: i32, %arg1: i32, %arg2: i32) -> (i32, i32, i32) {
    %c0_i32 = arith.constant 0 : i32
    %c0_i32_0 = arith.constant 0 : i32
    return %arg0, %c0_i32, %arg1 : i32, i32, i32
  }
  func.func @transform_1(%arg0: i32, %arg1: i32, %arg2: i32) -> (i32, i32, i32) {
    %c0_i32 = arith.constant 0 : i32
    %c0_i32_0 = arith.constant 0 : i32
    return %arg0, %c0_i32, %arg1 : i32, i32, i32
  }
  func.func @transform_2(%arg0: i32, %arg1: i32, %arg2: i32) -> (i32, i32, i32, i32) {
    %c0_i32 = arith.constant 0 : i32
    %c0_i32_0 = arith.constant 0 : i32
    return %arg2, %arg0, %c0_i32, %arg1 : i32, i32, i32, i32
  }
  func.func @transform_3(%arg0: i32, %arg1: i32, %arg2: i32) -> (i32, i32, i32, i32) {
    %c0_i32 = arith.constant 0 : i32
    %c0_i32_0 = arith.constant 0 : i32
    return %arg2, %arg0, %c0_i32, %arg1 : i32, i32, i32, i32
  }
}

</mosaic_0001>

<llo_original>
// kernel: tpu_custom_call.1
$region0: #{tpu_custom_call.1}
  #allocation0 [shape = 'u32[]', space=smem, size = 0x4, offset = 0x4, fixed_abs, tag = 'smem constant byte address 0x4 - core index']
  #allocation1 [shape = 'u32[72,128]{1,0:T(1,128)}', space=vmem, size = 0x9000, scoped, tag = 'internal scratch']
  %s0 = inlined_call_operand.hbm [shape: s32[2,1,256], index: 0, kind: input, shape index: {}]
  %s1 = inlined_call_operand.hbm [shape: f32[2,4,256], index: 1, kind: input, shape index: {}]
  %s2 = inlined_call_operand.hbm [shape: f32[2,2,4,256], index: 2, kind: output, shape index: {0}]
  %s3 = inlined_call_operand.vmem [shape: s32[2,2,4,256], index: 3, kind: output, shape index: {1}]
  %4 = xla_tuple %s2, %s3
  %s5 = sld [smem:[#allocation0]]
  $region57: #{tpu_custom_call.1} parent=0
    _
  %s7 = ssub.s32 1, %s5
  %s8 = scalar_select 0, %s7, %s5
  $region1: #{tpu_custom_call.1} parent=0
    #allocation2 [shape = 'u8[2048]{0}', space=vmem, size = 0x800, scoped, tag = 'input window, operand 0']
    #allocation3 [shape = 's32[2]{0}', space=sflag, size = 0x8, scoped, tag = 'scoped memory for tpu_custom_call.1']
    #allocation4 [shape = 's32[2]{0}', space=sflag, size = 0x8, scoped, tag = 'scoped memory for tpu_custom_call.1']
    #allocation5 [shape = 'u8[8192]{0}', space=vmem, size = 0x2000, scoped, tag = 'input window, operand 1']
    #allocation6 [shape = 's32[2]{0}', space=sflag, size = 0x8, scoped, tag = 'scoped memory for tpu_custom_call.1']
    #allocation7 [shape = 'u8[8192]{0}', space=vmem, size = 0x2000, scoped, tag = 'output window, operand 0']
    %9 = vsyncpa [#allocation3], 0
    %s10 = scalar_lea.sflag [#allocation3], 1
    %11 = vsyncpa %s10, 0
    %12 = vsyncpa [#allocation6], 0
    %s13 = scalar_lea.sflag [#allocation6], 1
    %14 = vsyncpa %s13, 0
    %15 = vsyncpa [#allocation4], 0
    %s16 = scalar_lea.sflag [#allocation4], 1
    %17 = vsyncpa %s16, 0
    loop: start=0, step=1, limit=6
    $region2: #{tpu_custom_call.1} parent=1 // loop_pre_header
      _
    $region3: #{tpu_custom_call.1} parent=1 // loop_header
      %s19 = sphi 0, %s23
      %p20 = scmp.ge.s32.totalorder %s19, 6
      %s26 = sphi 0, %s45
      %s27 = sphi 0, %s41
      %s28 = sphi 0, %s37
      %s29 = sphi 0, %s26
      %s30 = sphi 0, %s27
      %s31 = sphi 0, %s28
      %s32 = sphi 0, %s29
      %s33 = sphi 0, %s30
      %s34 = sphi 0, %s31
      %s50 = sphi 0, %s52
      %s53 = sphi 0, %s50
      %s54 = sphi 0, %s53
      %s70 = sphi 0, %s54
      %s78 = sphi 0, %s80
      %s81 = sphi 0, %s78
      %s82 = sphi 0, %s81
      %s98 = sphi 0, %s82
      %s108 = sphi 0, %s110
      %s111 = sphi 0, %s108
      %s112 = sphi 0, %s111
      %s128 = sphi 0, %s112
      %s138 = sphi 0, %s140
      %s141 = sphi 0, %s138
      %s142 = sphi 0, %s141
      %s158 = sphi 0, %s142
    $region4: #{tpu_custom_call.1} parent=1 // loop_header_branch
      %22 = sbr.rel (%p20) target = $region8
    $region5: #{tpu_custom_call.1} parent=1 // loop_body
      %s24 = ssub.s32 %s19, 1
      %s25 = ssub.s32 %s19, 2
      %s35 = sadd.s32 1, %s28
      %p36 = scmp.ge.s32.totalorder %s35, 2
      %s37 = scalar_select %p36, 0, %s35
      %s38 = sadd.s32 1, %s27
      %s39 = scalar_select %p36, %s38, %s27
      %p40 = scmp.ge.s32.totalorder %s39, 1
      %s41 = scalar_select %p40, 0, %s39
      %s42 = sadd.s32 1, %s26
      %s43 = scalar_select %p40, %s42, %s26
      %p44 = scmp.ge.s32.totalorder %s43, 2
      %s45 = scalar_select %p44, 0, %s43
      %s46 = ssub.s32 %s26, %s45
      %s47 = ssub.s32 %s27, %s41
      %s48 = sor.u32 %s46, %s47
      %p49 = scmp.eq.s32.totalorder %s48, 0
      %s51 = sadd.s32 %s50, 1
      %s52 = scalar_select %p49, %s50, %s51
      %p55 = pneg %p49
      %p56 = scmp.eq.s32.totalorder %s19, 3
      %p57 = por %p55, %p56
      %p58 = scmp.ne.s32.totalorder %s50, %s53
      %p59 = scmp.eq.s32.totalorder %s19, 0
      %p60 = por %p58, %p59
      %p61 = scmp.ne.s32.totalorder %s50, %s53
      %p62 = scmp.eq.s32.totalorder %s24, 3
      %p63 = por %p61, %p62
      %p64 = scmp.ne.s32.totalorder %s53, %s54
      %p65 = scmp.eq.s32.totalorder %s24, 0
      %p66 = por %p64, %p65
      %p67 = scmp.ne.s32.totalorder %s53, %s54
      %p68 = scmp.eq.s32.totalorder %s25, 3
      %p69 = por %p67, %p68
      %p71 = scmp.ne.s32.totalorder %s54, %s70
      %p72 = scmp.eq.s32.totalorder %s25, 0
      %p73 = por %p71, %p72
      %s74 = ssub.s32 %s26, %s45
      %s75 = ssub.s32 %s27, %s41
      %s76 = sor.u32 %s74, %s75
      %p77 = scmp.eq.s32.totalorder %s76, 0
      %s79 = sadd.s32 %s78, 1
      %s80 = scalar_select %p77, %s78, %s79
      %p83 = pneg %p77
      %p84 = scmp.eq.s32.totalorder %s19, 3
      %p85 = por %p83, %p84
      %p86 = scmp.ne.s32.totalorder %s78, %s81
      %p87 = scmp.eq.s32.totalorder %s19, 0
      %p88 = por %p86, %p87
      %p89 = scmp.ne.s32.totalorder %s78, %s81
      %p90 = scmp.eq.s32.totalorder %s24, 3
      %p91 = por %p89, %p90
      %p92 = scmp.ne.s32.totalorder %s81, %s82
      %p93 = scmp.eq.s32.totalorder %s24, 0
      %p94 = por %p92, %p93
      %p95 = scmp.ne.s32.totalorder %s81, %s82
      %p96 = scmp.eq.s32.totalorder %s25, 3
      %p97 = por %p95, %p96
      %p99 = scmp.ne.s32.totalorder %s82, %s98
      %p100 = scmp.eq.s32.totalorder %s25, 0
      %p101 = por %p99, %p100
      %s102 = ssub.s32 %s28, %s37
      %s103 = ssub.s32 %s26, %s45
      %s104 = sor.u32 %s102, %s103
      %s105 = ssub.s32 %s27, %s41
      %s106 = sor.u32 %s104, %s105
      %p107 = scmp.eq.s32.totalorder %s106, 0
      %s109 = sadd.s32 %s108, 1
      %s110 = scalar_select %p107, %s108, %s109
      %p113 = pneg %p107
      %p114 = scmp.eq.s32.totalorder %s19, 3
      %p115 = por %p113, %p114
      %p116 = scmp.ne.s32.totalorder %s108, %s111
      %p117 = scmp.eq.s32.totalorder %s19, 0
      %p118 = por %p116, %p117
      %p119 = scmp.ne.s32.totalorder %s108, %s111
      %p120 = scmp.eq.s32.totalorder %s24, 3
      %p121 = por %p119, %p120
      %p122 = scmp.ne.s32.totalorder %s111, %s112
      %p123 = scmp.eq.s32.totalorder %s24, 0
      %p124 = por %p122, %p123
      %p125 = scmp.ne.s32.totalorder %s111, %s112
      %p126 = scmp.eq.s32.totalorder %s25, 3
      %p127 = por %p125, %p126
      %p129 = scmp.ne.s32.totalorder %s112, %s128
      %p130 = scmp.eq.s32.totalorder %s25, 0
      %p131 = por %p129, %p130
      %s132 = ssub.s32 %s28, %s37
      %s133 = ssub.s32 %s26, %s45
      %s134 = sor.u32 %s132, %s133
      %s135 = ssub.s32 %s27, %s41
      %s136 = sor.u32 %s134, %s135
      %p137 = scmp.eq.s32.totalorder %s136, 0
      %s139 = sadd.s32 %s138, 1
      %s140 = scalar_select %p137, %s138, %s139
      %p143 = pneg %p137
      %p144 = scmp.eq.s32.totalorder %s19, 3
      %p145 = por %p143, %p144
      %p146 = scmp.ne.s32.totalorder %s138, %s141
      %p147 = scmp.eq.s32.totalorder %s19, 0
      %p148 = por %p146, %p147
      %p149 = scmp.ne.s32.totalorder %s138, %s141
      %p150 = scmp.eq.s32.totalorder %s24, 3
      %p151 = por %p149, %p150
      %p152 = scmp.ne.s32.totalorder %s141, %s142
      %p153 = scmp.eq.s32.totalorder %s24, 0
      %p154 = por %p152, %p153
      %p155 = scmp.ne.s32.totalorder %s141, %s142
      %p156 = scmp.eq.s32.totalorder %s25, 3
      %p157 = por %p155, %p156
      %p159 = scmp.ne.s32.totalorder %s142, %s158
      %p160 = scmp.eq.s32.totalorder %s25, 0
      %p161 = por %p159, %p160
      %p162 = scmp.le.s32.totalorder 1, %s19
      %p163 = scmp.lt.s32.totalorder %s19, 5
      %p164 = pnand %p162, %p163
      %p165 = pneg %p164
      // Predicated region
      $region9: #{tpu_custom_call.1} parent=5 // pred_check
        _
      $region10: #{tpu_custom_call.1} parent=5 // pred_check_branch
        %167 = sbr.rel (%p164) target = $region12
      $region11: #{tpu_custom_call.1} parent=5 // pred_region
        %s168 = ssub.s32 %s19, 1
      $region12: #{tpu_custom_call.1} parent=5 // pred_fallthru
        _
      %p169 = scmp.lt.s32.totalorder %s19, 4
      // Predicated region
      $region13: #{tpu_custom_call.1} parent=5 // pred_check
        %p170 = pneg %p169
      $region14: #{tpu_custom_call.1} parent=5 // pred_check_branch
        %172 = sbr.rel (%p170) target = $region16
      $region15: #{tpu_custom_call.1} parent=5 // pred_region
        // Predicated region
        $region17: #{tpu_custom_call.1} parent=15 // pred_check
          %p173 = pneg %p60
        $region18: #{tpu_custom_call.1} parent=15 // pred_check_branch
          %175 = sbr.rel (%p173) target = $region20
        $region19: #{tpu_custom_call.1} parent=15 // pred_region
          %s176 = sand.u32 %s50, 1
          %s177 = scalar_lea.sflag [#allocation3], %s176
          %s178 = sand.u32 %s50, 1
          %s179 = smul.addr %s178, 2
          %s180 = scalar_lea.vmem [#allocation2], %s179
          %s181 = smul.u32 2, %s27
          %183 = vsyncadd %s177, 0
          %s184 = smul.addr %s26, 2
          %s185 = sadd.s32 %s181, %s184
          %s186 = scalar_lea.hbm %s0, %s185
          %s188 = sshll.u32 %s186, 4
          %s189 = int_to_ptr.hbm [resolvable:$true] %s188
          %s190 = sshll.u32 %s180, 4
          %s191 = int_to_ptr.vmem [resolvable:$true] %s190
          %193 = dma.hbm_to_vmem [thread:$0]  %s189, 32, %s191, %s177
        $region20: #{tpu_custom_call.1} parent=15 // pred_fallthru
          _
        // Predicated region
        $region21: #{tpu_custom_call.1} parent=15 // pred_check
          %p194 = pneg %p88
        $region22: #{tpu_custom_call.1} parent=15 // pred_check_branch
          %196 = sbr.rel (%p194) target = $region24
        $region23: #{tpu_custom_call.1} parent=15 // pred_region
          %s197 = sand.u32 %s78, 1
          %s198 = scalar_lea.sflag [#allocation6], %s197
          %s199 = sand.u32 %s78, 1
          %s200 = smul.addr %s199, 8
          %s201 = scalar_lea.vmem [#allocation5], %s200
          %s202 = smul.u32 2, %s27
          %204 = vsyncadd %s198, 0
          %s205 = smul.addr %s26, 2
          %s206 = sadd.s32 %s202, %s205
          %s207 = smul.addr %s206, 4
          %s208 = scalar_lea.hbm %s1, %s207
          %s210 = sshll.u32 %s208, 4
          %s211 = int_to_ptr.hbm [resolvable:$true] %s210
          %s212 = sshll.u32 %s201, 4
          %s213 = int_to_ptr.vmem [resolvable:$true] %s212
          %215 = dma.hbm_to_vmem [thread:$0]  %s211, 128, %s213, %s198
        $region24: #{tpu_custom_call.1} parent=15 // pred_fallthru
          _
      $region16: #{tpu_custom_call.1} parent=5 // pred_fallthru
        _
      %p216 = scmp.le.s32.totalorder 1, %s19
      %p217 = scmp.lt.s32.totalorder %s19, 5
      %p218 = pnand %p216, %p217
      %p219 = pneg %p218
      // Predicated region
      $region25: #{tpu_custom_call.1} parent=5 // pred_check
        _
      $region26: #{tpu_custom_call.1} parent=5 // pred_check_branch
        %221 = sbr.rel (%p218) target = $region28
      $region27: #{tpu_custom_call.1} parent=5 // pred_region
        %s222 = ssub.s32 %s19, 1
        %s223 = sand.u32 %s53, 1
        %s224 = scalar_lea.sflag [#allocation3], %s223
        %s225 = sand.u32 %s53, 1
        %s226 = smul.addr %s225, 2
        %s227 = scalar_lea.vmem [#allocation2], %s226
        // Predicated region
        $region29: #{tpu_custom_call.1} parent=27 // pred_check
          %p228 = pneg %p66
        $region30: #{tpu_custom_call.1} parent=27 // pred_check_branch
          %230 = sbr.rel (%p228) target = $region32
        $region31: #{tpu_custom_call.1} parent=27 // pred_region
          %232 = dma.done %s224, 32
        $region32: #{tpu_custom_call.1} parent=27 // pred_fallthru
          _
        %s233 = sand.u32 %s81, 1
        %s234 = scalar_lea.sflag [#allocation6], %s233
        %s235 = sand.u32 %s81, 1
        %s236 = smul.addr %s235, 8
        %s237 = scalar_lea.vmem [#allocation5], %s236
        // Predicated region
        $region33: #{tpu_custom_call.1} parent=27 // pred_check
          %p238 = pneg %p94
        $region34: #{tpu_custom_call.1} parent=27 // pred_check_branch
          %240 = sbr.rel (%p238) target = $region36
        $region35: #{tpu_custom_call.1} parent=27 // pred_region
          %242 = dma.done %s234, 128
        $region36: #{tpu_custom_call.1} parent=27 // pred_fallthru
          _
        %s243 = sand.u32 %s53, 1
        %s244 = scalar_lea.sflag [#allocation3], %s243
        %s245 = sand.u32 %s53, 1
        %s246 = smul.addr %s245, 2
        %s247 = scalar_lea.vmem [#allocation2], %s246
        %p248 = pneg %p66
        %p249 = pneg %p63
        %s250 = sand.u32 %s81, 1
        %s251 = scalar_lea.sflag [#allocation6], %s250
        %s252 = sand.u32 %s81, 1
        %s253 = smul.addr %s252, 8
        %s254 = scalar_lea.vmem [#allocation5], %s253
        %p255 = pneg %p94
        %p256 = pneg %p91
        %p257 = pneg %p124
        %p258 = pneg %p121
        %s259 = sand.u32 %s111, 1
        %s260 = scalar_lea.sflag [#allocation4], %s259
        %s261 = sand.u32 %s111, 1
        %s262 = smul.addr %s261, 8
        %s263 = scalar_lea.vmem [#allocation7], %s262
        %p264 = pneg %p154
        %p265 = pneg %p151
        %s266 = smul.u32 2, %s30
        %p267 = scmp.lt.s32.totalorder %s31, 1
        %s268 = scalar_select %p267, %s31, 1
        %p269 = scmp.lt.s32.totalorder %s29, 1
        %s270 = scalar_select %p269, %s29, 1
        %p271 = scmp.lt.s32.totalorder %s266, 1
        %s272 = scalar_select %p271, %s266, 1
        %s273 = smul.addr %s270, 2
        %s274 = sadd.s32 %s272, %s273
        %s275 = smul.addr %s268, 4
        %s276 = sadd.s32 %s274, %s275
        %s277 = smul.addr %s276, 4
        %s278 = scalar_lea.vmem %s3, %s277
        %s279 = smul.u32 2, %s30
        %s280 = smul.u32 2, %s30
        %s281 = smul.u32 2, %s30
        %s282 = smul.u32 2, %s30
        %p283 = scmp.lt.s32.totalorder %s31, 1
        %s284 = scalar_select %p283, %s31, 1
        %p285 = scmp.lt.s32.totalorder %s29, 1
        %s286 = scalar_select %p285, %s29, 1
        %p287 = scmp.lt.s32.totalorder %s282, 1
        %s288 = scalar_select %p287, %s282, 1
        %s289 = smul.addr %s286, 2
        %s290 = sadd.s32 %s288, %s289
        %s291 = smul.addr %s284, 4
        %s292 = sadd.s32 %s290, %s291
        %s293 = smul.addr %s292, 4
        %s294 = scalar_lea.vmem %s3, %s293
        %s295 = smul.u32 2, %s30
        %v296 = vld [vmem:[%s227] sm:$0x3]
        %v297 = vstv %s31
        %vm298 = vcmp.ne.s32.totalorder %v296, %v297
        %v299 = vld [vmem:[%s237] sm:$0xff]
        %v300 = vsel %vm298, 1, 0
        %v301 = vcvt.s32.f32 %v300
        %v303 = vperm.slane %v301, 0
        %v304 = vperm.slane %v301, 1
        %v305 = vrot.slane %v304, 4
        %vm306 = vcmask 1043456
        %v307 = vsel %vm306, %v303, %v305
        %v309 = vmul.f32 %v299, %v307
        %310 = vst [vmem:[%s263] sm:$0xff] %v309
        %v311 = vperm.slane %v300, 0
        %v312 = vperm.slane %v300, 1
        %vm313 = vcmp.eq.s32.totalorder %v311, 1
        %vm314 = vcmp.eq.s32.totalorder %v312, 1
        %v315 = vsel %vm313, 1, 0
        %v316 = vsel %vm314, 1, 0
        %v317 = vrot.slane %v316, 4
        %v318 = vsel %vm306, %v315, %v317
        %319 = vst [vmem:[%s294] sm:$0xff] %v318
        %s320 = sand.u32 %s111, 1
        %s321 = scalar_lea.sflag [#allocation4], %s320
        %s322 = sand.u32 %s111, 1
        %s323 = smul.addr %s322, 8
        %s324 = scalar_lea.vmem [#allocation7], %s323
        %s325 = smul.u32 2, %s30
        %p326 = scmp.lt.s32.totalorder %s31, 1
        %s327 = scalar_select %p326, %s31, 1
        %p328 = scmp.lt.s32.totalorder %s29, 1
        %s329 = scalar_select %p328, %s29, 1
        %p330 = scmp.lt.s32.totalorder %s325, 1
        %s331 = scalar_select %p330, %s325, 1
        %s332 = smul.addr %s329, 2
        %s333 = sadd.s32 %s331, %s332
        %s334 = smul.addr %s327, 4
        %s335 = sadd.s32 %s333, %s334
        %s336 = smul.addr %s335, 4
        %s337 = scalar_lea.vmem %s3, %s336
        // Predicated region
        $region37: #{tpu_custom_call.1} parent=27 // pred_check
          %p338 = pneg %p121
        $region38: #{tpu_custom_call.1} parent=27 // pred_check_branch
          %340 = sbr.rel (%p338) target = $region40
        $region39: #{tpu_custom_call.1} parent=27 // pred_region
          %s341 = smul.u32 2, %s30
          %343 = vsyncadd %s321, 0
          %s344 = smul.addr %s29, 2
          %s345 = sadd.s32 %s341, %s344
          %s346 = smul.addr %s31, 4
          %s347 = sadd.s32 %s345, %s346
          %s348 = smul.addr %s347, 4
          %s349 = scalar_lea.hbm %s2, %s348
          %s351 = sshll.u32 %s324, 4
          %s352 = int_to_ptr.vmem [resolvable:$true] %s351
          %s353 = sshll.u32 %s349, 4
          %s354 = int_to_ptr.hbm [resolvable:$true] %s353
          %356 = dma.vmem_to_hbm [thread:$0]  %s352, 128, %s354, %s321
        $region40: #{tpu_custom_call.1} parent=27 // pred_fallthru
          _
        // Predicated region
        $region41: #{tpu_custom_call.1} parent=27 // pred_check
          %p357 = pneg %p151
        $region42: #{tpu_custom_call.1} parent=27 // pred_check_branch
          %359 = sbr.rel (%p357) target = $region44
        $region43: #{tpu_custom_call.1} parent=27 // pred_region
          %s360 = smul.u32 2, %s30
        $region44: #{tpu_custom_call.1} parent=27 // pred_fallthru
          _
      $region28: #{tpu_custom_call.1} parent=5 // pred_fallthru
        _
      %p361 = scmp.le.s32.totalorder 2, %s19
      // Predicated region
      $region45: #{tpu_custom_call.1} parent=5 // pred_check
        %p362 = pneg %p361
      $region46: #{tpu_custom_call.1} parent=5 // pred_check_branch
        %364 = sbr.rel (%p362) target = $region48
      $region47: #{tpu_custom_call.1} parent=5 // pred_region
        %s365 = ssub.s32 %s19, 2
        // Predicated region
        $region49: #{tpu_custom_call.1} parent=47 // pred_check
          %p366 = pneg %p127
        $region50: #{tpu_custom_call.1} parent=47 // pred_check_branch
          %368 = sbr.rel (%p366) target = $region52
        $region51: #{tpu_custom_call.1} parent=47 // pred_region
          %s369 = sand.u32 %s112, 1
          %s370 = scalar_lea.sflag [#allocation4], %s369
          %s371 = sand.u32 %s112, 1
          %s372 = smul.addr %s371, 8
          %s373 = scalar_lea.vmem [#allocation7], %s372
          %375 = dma.done %s370, 128
        $region52: #{tpu_custom_call.1} parent=47 // pred_fallthru
          _
        // Predicated region
        $region53: #{tpu_custom_call.1} parent=47 // pred_check
          %p376 = pneg %p157
        $region54: #{tpu_custom_call.1} parent=47 // pred_check_branch
          %378 = sbr.rel (%p376) target = $region56
        $region55: #{tpu_custom_call.1} parent=47 // pred_region
          %s379 = smul.u32 2, %s33
          %p380 = scmp.lt.s32.totalorder %s34, 1
          %s381 = scalar_select %p380, %s34, 1
          %p382 = scmp.lt.s32.totalorder %s32, 1
          %s383 = scalar_select %p382, %s32, 1
          %p384 = scmp.lt.s32.totalorder %s379, 1
          %s385 = scalar_select %p384, %s379, 1
          %s386 = smul.addr %s383, 2
          %s387 = sadd.s32 %s385, %s386
          %s388 = smul.addr %s381, 4
          %s389 = sadd.s32 %s387, %s388
          %s390 = smul.addr %s389, 4
          %s391 = scalar_lea.vmem %s3, %s390
        $region56: #{tpu_custom_call.1} parent=47 // pred_fallthru
          _
      $region48: #{tpu_custom_call.1} parent=5 // pred_fallthru
        _
    $region6: #{tpu_custom_call.1} parent=1 // loop_footer
      %s23 = sadd.s32 1, %s19
    $region7: #{tpu_custom_call.1} parent=1 // loop_footer_branch
      %18 = sbr.rel target = $region3
    $region8: #{tpu_custom_call.1} parent=1 // loop_exit
      _
    %392 = vsyncpa [#allocation3], 1
    %s393 = scalar_lea.sflag [#allocation3], 1
    %394 = vsyncpa %s393, 1
    %395 = vsyncpa [#allocation6], 1
    %s396 = scalar_lea.sflag [#allocation6], 1
    %397 = vsyncpa %s396, 1
    %398 = vsyncpa [#allocation4], 1
    %s399 = scalar_lea.sflag [#allocation4], 1
    %400 = vsyncpa %s399, 1

// kernel: tpu_custom_call.1
$region0: #{tpu_custom_call.1}
  #allocation0 [shape = 'u32[]', space=smem, size = 0x4, offset = 0x4, fixed_abs, tag = 'smem constant byte address 0x4 - core index']
  #allocation1 [shape = 'u32[72,128]{1,0:T(1,128)}', space=vmem, size = 0x9000, scoped, tag = 'internal scratch']
  %s0 = inlined_call_operand.hbm [shape: s32[2,1,256], index: 0, kind: input, shape index: {}]
  %s1 = inlined_call_operand.hbm [shape: f32[2,4,256], index: 1, kind: input, shape index: {}]
  %s2 = inlined_call_operand.hbm [shape: f32[2,2,4,256], index: 2, kind: output, shape index: {0}]
  %s3 = inlined_call_operand.hbm [shape: s8[2,2,4,256], index: 3, kind: output, shape index: {1}]
  %4 = xla_tuple %s2, %s3
  %s5 = sld [smem:[#allocation0]]
  $region57: #{tpu_custom_call.1} parent=0
    _
  %s7 = ssub.s32 1, %s5
  %s8 = scalar_select 0, %s7, %s5
  $region1: #{tpu_custom_call.1} parent=0
    #allocation2 [shape = 'u8[2048]{0}', space=vmem, size = 0x800, scoped, tag = 'input window, operand 0']
    #allocation3 [shape = 's32[2]{0}', space=sflag, size = 0x8, scoped, tag = 'scoped memory for tpu_custom_call.1']
    #allocation4 [shape = 's32[2]{0}', space=sflag, size = 0x8, scoped, tag = 'scoped memory for tpu_custom_call.1']
    #allocation5 [shape = 'u8[8192]{0}', space=vmem, size = 0x2000, scoped, tag = 'input window, operand 1']
    #allocation6 [shape = 's32[2]{0}', space=sflag, size = 0x8, scoped, tag = 'scoped memory for tpu_custom_call.1']
    #allocation7 [shape = 'u8[8192]{0}', space=vmem, size = 0x2000, scoped, tag = 'output window, operand 0']
    #allocation8 [shape = 'u8[2048]{0}', space=vmem, size = 0x800, scoped, tag = 'output window, operand 1']
    #allocation9 [shape = 's32[2]{0}', space=sflag, size = 0x8, scoped, tag = 'scoped memory for tpu_custom_call.1']
    %9 = vsyncpa [#allocation3], 0
    %s10 = scalar_lea.sflag [#allocation3], 1
    %11 = vsyncpa %s10, 0
    %12 = vsyncpa [#allocation6], 0
    %s13 = scalar_lea.sflag [#allocation6], 1
    %14 = vsyncpa %s13, 0
    %15 = vsyncpa [#allocation4], 0
    %s16 = scalar_lea.sflag [#allocation4], 1
    %17 = vsyncpa %s16, 0
    %18 = vsyncpa [#allocation9], 0
    %s19 = scalar_lea.sflag [#allocation9], 1
    %20 = vsyncpa %s19, 0
    loop: start=0, step=1, limit=6
    $region2: #{tpu_custom_call.1} parent=1 // loop_pre_header
      _
    $region3: #{tpu_custom_call.1} parent=1 // loop_header
      %s22 = sphi 0, %s26
      %p23 = scmp.ge.s32.totalorder %s22, 6
      %s29 = sphi 0, %s48
      %s30 = sphi 0, %s44
      %s31 = sphi 0, %s40
      %s32 = sphi 0, %s29
      %s33 = sphi 0, %s30
      %s34 = sphi 0, %s31
      %s35 = sphi 0, %s32
      %s36 = sphi 0, %s33
      %s37 = sphi 0, %s34
      %s53 = sphi 0, %s55
      %s56 = sphi 0, %s53
      %s57 = sphi 0, %s56
      %s73 = sphi 0, %s57
      %s81 = sphi 0, %s83
      %s84 = sphi 0, %s81
      %s85 = sphi 0, %s84
      %s101 = sphi 0, %s85
      %s111 = sphi 0, %s113
      %s114 = sphi 0, %s111
      %s115 = sphi 0, %s114
      %s131 = sphi 0, %s115
      %s141 = sphi 0, %s143
      %s144 = sphi 0, %s141
      %s145 = sphi 0, %s144
      %s161 = sphi 0, %s145
    $region4: #{tpu_custom_call.1} parent=1 // loop_header_branch
      %25 = sbr.rel (%p23) target = $region8
    $region5: #{tpu_custom_call.1} parent=1 // loop_body
      %s27 = ssub.s32 %s22, 1
      %s28 = ssub.s32 %s22, 2
      %s38 = sadd.s32 1, %s31
      %p39 = scmp.ge.s32.totalorder %s38, 2
      %s40 = scalar_select %p39, 0, %s38
      %s41 = sadd.s32 1, %s30
      %s42 = scalar_select %p39, %s41, %s30
      %p43 = scmp.ge.s32.totalorder %s42, 1
      %s44 = scalar_select %p43, 0, %s42
      %s45 = sadd.s32 1, %s29
      %s46 = scalar_select %p43, %s45, %s29
      %p47 = scmp.ge.s32.totalorder %s46, 2
      %s48 = scalar_select %p47, 0, %s46
      %s49 = ssub.s32 %s29, %s48
      %s50 = ssub.s32 %s30, %s44
      %s51 = sor.u32 %s49, %s50
      %p52 = scmp.eq.s32.totalorder %s51, 0
      %s54 = sadd.s32 %s53, 1
      %s55 = scalar_select %p52, %s53, %s54
      %p58 = pneg %p52
      %p59 = scmp.eq.s32.totalorder %s22, 3
      %p60 = por %p58, %p59
      %p61 = scmp.ne.s32.totalorder %s53, %s56
      %p62 = scmp.eq.s32.totalorder %s22, 0
      %p63 = por %p61, %p62
      %p64 = scmp.ne.s32.totalorder %s53, %s56
      %p65 = scmp.eq.s32.totalorder %s27, 3
      %p66 = por %p64, %p65
      %p67 = scmp.ne.s32.totalorder %s56, %s57
      %p68 = scmp.eq.s32.totalorder %s27, 0
      %p69 = por %p67, %p68
      %p70 = scmp.ne.s32.totalorder %s56, %s57
      %p71 = scmp.eq.s32.totalorder %s28, 3
      %p72 = por %p70, %p71
      %p74 = scmp.ne.s32.totalorder %s57, %s73
      %p75 = scmp.eq.s32.totalorder %s28, 0
      %p76 = por %p74, %p75
      %s77 = ssub.s32 %s29, %s48
      %s78 = ssub.s32 %s30, %s44
      %s79 = sor.u32 %s77, %s78
      %p80 = scmp.eq.s32.totalorder %s79, 0
      %s82 = sadd.s32 %s81, 1
      %s83 = scalar_select %p80, %s81, %s82
      %p86 = pneg %p80
      %p87 = scmp.eq.s32.totalorder %s22, 3
      %p88 = por %p86, %p87
      %p89 = scmp.ne.s32.totalorder %s81, %s84
      %p90 = scmp.eq.s32.totalorder %s22, 0
      %p91 = por %p89, %p90
      %p92 = scmp.ne.s32.totalorder %s81, %s84
      %p93 = scmp.eq.s32.totalorder %s27, 3
      %p94 = por %p92, %p93
      %p95 = scmp.ne.s32.totalorder %s84, %s85
      %p96 = scmp.eq.s32.totalorder %s27, 0
      %p97 = por %p95, %p96
      %p98 = scmp.ne.s32.totalorder %s84, %s85
      %p99 = scmp.eq.s32.totalorder %s28, 3
      %p100 = por %p98, %p99
      %p102 = scmp.ne.s32.totalorder %s85, %s101
      %p103 = scmp.eq.s32.totalorder %s28, 0
      %p104 = por %p102, %p103
      %s105 = ssub.s32 %s31, %s40
      %s106 = ssub.s32 %s29, %s48
      %s107 = sor.u32 %s105, %s106
      %s108 = ssub.s32 %s30, %s44
      %s109 = sor.u32 %s107, %s108
      %p110 = scmp.eq.s32.totalorder %s109, 0
      %s112 = sadd.s32 %s111, 1
      %s113 = scalar_select %p110, %s111, %s112
      %p116 = pneg %p110
      %p117 = scmp.eq.s32.totalorder %s22, 3
      %p118 = por %p116, %p117
      %p119 = scmp.ne.s32.totalorder %s111, %s114
      %p120 = scmp.eq.s32.totalorder %s22, 0
      %p121 = por %p119, %p120
      %p122 = scmp.ne.s32.totalorder %s111, %s114
      %p123 = scmp.eq.s32.totalorder %s27, 3
      %p124 = por %p122, %p123
      %p125 = scmp.ne.s32.totalorder %s114, %s115
      %p126 = scmp.eq.s32.totalorder %s27, 0
      %p127 = por %p125, %p126
      %p128 = scmp.ne.s32.totalorder %s114, %s115
      %p129 = scmp.eq.s32.totalorder %s28, 3
      %p130 = por %p128, %p129
      %p132 = scmp.ne.s32.totalorder %s115, %s131
      %p133 = scmp.eq.s32.totalorder %s28, 0
      %p134 = por %p132, %p133
      %s135 = ssub.s32 %s31, %s40
      %s136 = ssub.s32 %s29, %s48
      %s137 = sor.u32 %s135, %s136
      %s138 = ssub.s32 %s30, %s44
      %s139 = sor.u32 %s137, %s138
      %p140 = scmp.eq.s32.totalorder %s139, 0
      %s142 = sadd.s32 %s141, 1
      %s143 = scalar_select %p140, %s141, %s142
      %p146 = pneg %p140
      %p147 = scmp.eq.s32.totalorder %s22, 3
      %p148 = por %p146, %p147
      %p149 = scmp.ne.s32.totalorder %s141, %s144
      %p150 = scmp.eq.s32.totalorder %s22, 0
      %p151 = por %p149, %p150
      %p152 = scmp.ne.s32.totalorder %s141, %s144
      %p153 = scmp.eq.s32.totalorder %s27, 3
      %p154 = por %p152, %p153
      %p155 = scmp.ne.s32.totalorder %s144, %s145
      %p156 = scmp.eq.s32.totalorder %s27, 0
      %p157 = por %p155, %p156
      %p158 = scmp.ne.s32.totalorder %s144, %s145
      %p159 = scmp.eq.s32.totalorder %s28, 3
      %p160 = por %p158, %p159
      %p162 = scmp.ne.s32.totalorder %s145, %s161
      %p163 = scmp.eq.s32.totalorder %s28, 0
      %p164 = por %p162, %p163
      %p165 = scmp.le.s32.totalorder 1, %s22
      %p166 = scmp.lt.s32.totalorder %s22, 5
      %p167 = pnand %p165, %p166
      %p168 = pneg %p167
      // Predicated region
      $region9: #{tpu_custom_call.1} parent=5 // pred_check
        _
      $region10: #{tpu_custom_call.1} parent=5 // pred_check_branch
        %170 = sbr.rel (%p167) target = $region12
      $region11: #{tpu_custom_call.1} parent=5 // pred_region
        %s171 = ssub.s32 %s22, 1
      $region12: #{tpu_custom_call.1} parent=5 // pred_fallthru
        _
      %p172 = scmp.lt.s32.totalorder %s22, 4
      // Predicated region
      $region13: #{tpu_custom_call.1} parent=5 // pred_check
        %p173 = pneg %p172
      $region14: #{tpu_custom_call.1} parent=5 // pred_check_branch
        %175 = sbr.rel (%p173) target = $region16
      $region15: #{tpu_custom_call.1} parent=5 // pred_region
        // Predicated region
        $region17: #{tpu_custom_call.1} parent=15 // pred_check
          %p176 = pneg %p63
        $region18: #{tpu_custom_call.1} parent=15 // pred_check_branch
          %178 = sbr.rel (%p176) target = $region20
        $region19: #{tpu_custom_call.1} parent=15 // pred_region
          %s179 = sand.u32 %s53, 1
          %s180 = scalar_lea.sflag [#allocation3], %s179
          %s181 = sand.u32 %s53, 1
          %s182 = smul.addr %s181, 2
          %s183 = scalar_lea.vmem [#allocation2], %s182
          %s184 = smul.u32 2, %s30
          %186 = vsyncadd %s180, 0
          %s187 = smul.addr %s29, 2
          %s188 = sadd.s32 %s184, %s187
          %s189 = scalar_lea.hbm %s0, %s188
          %s191 = sshll.u32 %s189, 4
          %s192 = int_to_ptr.hbm [resolvable:$true] %s191
          %s193 = sshll.u32 %s183, 4
          %s194 = int_to_ptr.vmem [resolvable:$true] %s193
          %196 = dma.hbm_to_vmem [thread:$0]  %s192, 32, %s194, %s180
        $region20: #{tpu_custom_call.1} parent=15 // pred_fallthru
          _
        // Predicated region
        $region21: #{tpu_custom_call.1} parent=15 // pred_check
          %p197 = pneg %p91
        $region22: #{tpu_custom_call.1} parent=15 // pred_check_branch
          %199 = sbr.rel (%p197) target = $region24
        $region23: #{tpu_custom_call.1} parent=15 // pred_region
          %s200 = sand.u32 %s81, 1
          %s201 = scalar_lea.sflag [#allocation6], %s200
          %s202 = sand.u32 %s81, 1
          %s203 = smul.addr %s202, 8
          %s204 = scalar_lea.vmem [#allocation5], %s203
          %s205 = smul.u32 2, %s30
          %207 = vsyncadd %s201, 0
          %s208 = smul.addr %s29, 2
          %s209 = sadd.s32 %s205, %s208
          %s210 = smul.addr %s209, 4
          %s211 = scalar_lea.hbm %s1, %s210
          %s213 = sshll.u32 %s211, 4
          %s214 = int_to_ptr.hbm [resolvable:$true] %s213
          %s215 = sshll.u32 %s204, 4
          %s216 = int_to_ptr.vmem [resolvable:$true] %s215
          %218 = dma.hbm_to_vmem [thread:$0]  %s214, 128, %s216, %s201
        $region24: #{tpu_custom_call.1} parent=15 // pred_fallthru
          _
      $region16: #{tpu_custom_call.1} parent=5 // pred_fallthru
        _
      %p219 = scmp.le.s32.totalorder 1, %s22
      %p220 = scmp.lt.s32.totalorder %s22, 5
      %p221 = pnand %p219, %p220
      %p222 = pneg %p221
      // Predicated region
      $region25: #{tpu_custom_call.1} parent=5 // pred_check
        _
      $region26: #{tpu_custom_call.1} parent=5 // pred_check_branch
        %224 = sbr.rel (%p221) target = $region28
      $region27: #{tpu_custom_call.1} parent=5 // pred_region
        %s225 = ssub.s32 %s22, 1
        %s226 = sand.u32 %s56, 1
        %s227 = scalar_lea.sflag [#allocation3], %s226
        %s228 = sand.u32 %s56, 1
        %s229 = smul.addr %s228, 2
        %s230 = scalar_lea.vmem [#allocation2], %s229
        // Predicated region
        $region29: #{tpu_custom_call.1} parent=27 // pred_check
          %p231 = pneg %p69
        $region30: #{tpu_custom_call.1} parent=27 // pred_check_branch
          %233 = sbr.rel (%p231) target = $region32
        $region31: #{tpu_custom_call.1} parent=27 // pred_region
          %235 = dma.done %s227, 32
        $region32: #{tpu_custom_call.1} parent=27 // pred_fallthru
          _
        %s236 = sand.u32 %s84, 1
        %s237 = scalar_lea.sflag [#allocation6], %s236
        %s238 = sand.u32 %s84, 1
        %s239 = smul.addr %s238, 8
        %s240 = scalar_lea.vmem [#allocation5], %s239
        // Predicated region
        $region33: #{tpu_custom_call.1} parent=27 // pred_check
          %p241 = pneg %p97
        $region34: #{tpu_custom_call.1} parent=27 // pred_check_branch
          %243 = sbr.rel (%p241) target = $region36
        $region35: #{tpu_custom_call.1} parent=27 // pred_region
          %245 = dma.done %s237, 128
        $region36: #{tpu_custom_call.1} parent=27 // pred_fallthru
          _
        %s246 = sand.u32 %s56, 1
        %s247 = scalar_lea.sflag [#allocation3], %s246
        %s248 = sand.u32 %s56, 1
        %s249 = smul.addr %s248, 2
        %s250 = scalar_lea.vmem [#allocation2], %s249
        %p251 = pneg %p69
        %p252 = pneg %p66
        %s253 = sand.u32 %s84, 1
        %s254 = scalar_lea.sflag [#allocation6], %s253
        %s255 = sand.u32 %s84, 1
        %s256 = smul.addr %s255, 8
        %s257 = scalar_lea.vmem [#allocation5], %s256
        %p258 = pneg %p97
        %p259 = pneg %p94
        %p260 = pneg %p127
        %p261 = pneg %p124
        %s262 = sand.u32 %s114, 1
        %s263 = scalar_lea.sflag [#allocation4], %s262
        %s264 = sand.u32 %s114, 1
        %s265 = smul.addr %s264, 8
        %s266 = scalar_lea.vmem [#allocation7], %s265
        %p267 = pneg %p157
        %p268 = pneg %p154
        %s269 = sand.u32 %s144, 1
        %s270 = scalar_lea.sflag [#allocation9], %s269
        %s271 = sand.u32 %s144, 1
        %s272 = smul.addr %s271, 2
        %s273 = scalar_lea.vmem [#allocation8], %s272
        %s274 = smul.u32 2, %s33
        %s275 = smul.u32 2, %s33
        %s276 = smul.u32 2, %s33
        %s277 = smul.u32 2, %s33
        %v280 = vld [vmem:[%s230] sm:$0x3]
        %v281 = vstv %s34
        %vm282 = vcmp.ne.s32.totalorder %v280, %v281
        %v283 = vld [vmem:[%s240] sm:$0xff]
        %v284 = vsel %vm282, 1, 0
        %v285 = vcvt.s32.f32 %v284
        %v287 = vperm.slane %v285, 0
        %v288 = vperm.slane %v285, 1
        %v289 = vrot.slane %v288, 4
        %vm290 = vcmask 1043456
        %v291 = vsel %vm290, %v287, %v289
        %v293 = vmul.f32 %v283, %v291
        %294 = vst [vmem:[%s266] sm:$0xff] %v293
        %v295 = vperm.slane %v284, 0
        %v296 = vperm.slane %v284, 1
        %vm297 = vcmp.eq.s32.totalorder %v295, 1
        %vm298 = vcmp.eq.s32.totalorder %v296, 1
        %vm299 = vmpackc.low %vm298, %vm297
        %v300 = vsel %vm299, 16711935, 0
        %v301 = vsel %vm299, 16711935, 0
        %v302 = vpack.c.b8 %v301, %v300
        %vm303 = vnez %v302
        %v304 = vsel %vm303, 16843009, 0
        %v305 = vperm.slane %v304, 0
        %v306 = vperm.slane %v304, 2
        %vm307 = vnez %v305
        %vm308 = vnez %v306
        %v309 = vsel %vm307, 16843009, 0
        %v310 = vsel %vm308, 16843009, 0
        %v311 = vrot.slane %v310, 7
        %vm312 = vcmask 1040384
        %v315 = vsel %vm312, %v309, %v311
        %317 = vst [vmem:[%s273] sm:$0x3] %v315
        %s318 = sand.u32 %s114, 1
        %s319 = scalar_lea.sflag [#allocation4], %s318
        %s320 = sand.u32 %s114, 1
        %s321 = smul.addr %s320, 8
        %s322 = scalar_lea.vmem [#allocation7], %s321
        %s323 = sand.u32 %s144, 1
        %s324 = scalar_lea.sflag [#allocation9], %s323
        %s325 = sand.u32 %s144, 1
        %s326 = smul.addr %s325, 2
        %s327 = scalar_lea.vmem [#allocation8], %s326
        // Predicated region
        $region37: #{tpu_custom_call.1} parent=27 // pred_check
          %p328 = pneg %p124
        $region38: #{tpu_custom_call.1} parent=27 // pred_check_branch
          %330 = sbr.rel (%p328) target = $region40
        $region39: #{tpu_custom_call.1} parent=27 // pred_region
          %s331 = smul.u32 2, %s33
          %333 = vsyncadd %s319, 0
          %s334 = smul.addr %s32, 2
          %s335 = sadd.s32 %s331, %s334
          %s336 = smul.addr %s34, 4
          %s337 = sadd.s32 %s335, %s336
          %s338 = smul.addr %s337, 4
          %s339 = scalar_lea.hbm %s2, %s338
          %s341 = sshll.u32 %s322, 4
          %s342 = int_to_ptr.vmem [resolvable:$true] %s341
          %s343 = sshll.u32 %s339, 4
          %s344 = int_to_ptr.hbm [resolvable:$true] %s343
          %346 = dma.vmem_to_hbm [thread:$0]  %s342, 128, %s344, %s319
        $region40: #{tpu_custom_call.1} parent=27 // pred_fallthru
          _
        // Predicated region
        $region41: #{tpu_custom_call.1} parent=27 // pred_check
          %p347 = pneg %p154
        $region42: #{tpu_custom_call.1} parent=27 // pred_check_branch
          %349 = sbr.rel (%p347) target = $region44
        $region43: #{tpu_custom_call.1} parent=27 // pred_region
          %s350 = smul.u32 2, %s33
          %352 = vsyncadd %s324, 0
          %s353 = smul.addr %s32, 2
          %s354 = sadd.s32 %s350, %s353
          %s355 = smul.addr %s34, 4
          %s356 = sadd.s32 %s354, %s355
          %s357 = scalar_lea.hbm %s3, %s356
          %s359 = sshll.u32 %s327, 4
          %s360 = int_to_ptr.vmem [resolvable:$true] %s359
          %s361 = sshll.u32 %s357, 4
          %s362 = int_to_ptr.hbm [resolvable:$true] %s361
          %364 = dma.vmem_to_hbm [thread:$0]  %s360, 32, %s362, %s324
        $region44: #{tpu_custom_call.1} parent=27 // pred_fallthru
          _
      $region28: #{tpu_custom_call.1} parent=5 // pred_fallthru
        _
      %p365 = scmp.le.s32.totalorder 2, %s22
      // Predicated region
      $region45: #{tpu_custom_call.1} parent=5 // pred_check
        %p366 = pneg %p365
      $region46: #{tpu_custom_call.1} parent=5 // pred_check_branch
        %368 = sbr.rel (%p366) target = $region48
      $region47: #{tpu_custom_call.1} parent=5 // pred_region
        %s369 = ssub.s32 %s22, 2
        // Predicated region
        $region49: #{tpu_custom_call.1} parent=47 // pred_check
          %p370 = pneg %p130
        $region50: #{tpu_custom_call.1} parent=47 // pred_check_branch
          %372 = sbr.rel (%p370) target = $region52
        $region51: #{tpu_custom_call.1} parent=47 // pred_region
          %s373 = sand.u32 %s115, 1
          %s374 = scalar_lea.sflag [#allocation4], %s373
          %s375 = sand.u32 %s115, 1
          %s376 = smul.addr %s375, 8
          %s377 = scalar_lea.vmem [#allocation7], %s376
          %379 = dma.done %s374, 128
        $region52: #{tpu_custom_call.1} parent=47 // pred_fallthru
          _
        // Predicated region
        $region53: #{tpu_custom_call.1} parent=47 // pred_check
          %p380 = pneg %p160
        $region54: #{tpu_custom_call.1} parent=47 // pred_check_branch
          %382 = sbr.rel (%p380) target = $region56
        $region55: #{tpu_custom_call.1} parent=47 // pred_region
          %s383 = sand.u32 %s145, 1
          %s384 = scalar_lea.sflag [#allocation9], %s383
          %s385 = sand.u32 %s145, 1
          %s386 = smul.addr %s385, 2
          %s387 = scalar_lea.vmem [#allocation8], %s386
          %389 = dma.done %s384, 32
        $region56: #{tpu_custom_call.1} parent=47 // pred_fallthru
          _
      $region48: #{tpu_custom_call.1} parent=5 // pred_fallthru
        _
    $region6: #{tpu_custom_call.1} parent=1 // loop_footer
      %s26 = sadd.s32 1, %s22
    $region7: #{tpu_custom_call.1} parent=1 // loop_footer_branch
      %21 = sbr.rel target = $region3
    $region8: #{tpu_custom_call.1} parent=1 // loop_exit
      _
    %390 = vsyncpa [#allocation3], 1
    %s391 = scalar_lea.sflag [#allocation3], 1
    %392 = vsyncpa %s391, 1
    %393 = vsyncpa [#allocation6], 1
    %s394 = scalar_lea.sflag [#allocation6], 1
    %395 = vsyncpa %s394, 1
    %396 = vsyncpa [#allocation4], 1
    %s397 = scalar_lea.sflag [#allocation4], 1
    %398 = vsyncpa %s397, 1
    %399 = vsyncpa [#allocation9], 1
    %s400 = scalar_lea.sflag [#allocation9], 1
    %401 = vsyncpa %s400, 1

</llo_original>
